<compile_context>
chip_gen: v7x
topology: tpu7x:2x2x1
jax: 0.10.0
libtpu: 0.0.40
codegen_flags: <defaults>
</compile_context>

<pallas_src>
import jax
import jax.numpy as jnp
from jax.experimental import pallas as pl
from jax.experimental.pallas import tpu as pltpu


def _sft_uv_kernel(cond_ref, feat_ref, w0_ref, b0_ref, w1_ref, b1_ref, out_ref):
    # cond: (128, TP)           feat/out: (C, TP)
    # w0:   (2H, 128)  bf16     b0: (2H, 1) f32
    # w1:   (2C, 2H)   bf16     b1: (2C, 1) f32  (scale rows already include +1)
    cond = cond_ref[...].astype(jnp.bfloat16)

    # Fused conv0 of both branches: (2H, 128) @ (128, TP) -> (2H, TP), f32 acc.
    hid = jnp.dot(w0_ref[...], cond, preferred_element_type=jnp.float32)
    hid = hid + b0_ref[...]
    hid = jnp.where(hid >= 0, hid, 0.1 * hid)          # leaky_relu(0.1), in f32

    # Fused conv1 of both branches via block-diagonal weight (bf16 operands):
    # rows [:C] -> scale, rows [C:] -> shift.
    ss = jnp.dot(w1_ref[...], hid.astype(jnp.bfloat16),
                 preferred_element_type=jnp.float32)
    ss = ss + b1_ref[...]

    c_feat = out_ref.shape[0]
    scale_p1 = ss[:c_feat, :]        # (scale + 1): the +1 lives in b1 already
    shift = ss[c_feat:, :]

    feat = feat_ref[...].astype(jnp.float32)
    out_ref[...] = (feat * scale_p1 + shift).astype(out_ref.dtype)


def fuse_sft_params(params, inplanes):
    """One-time fusion of the two branches' 1x1-conv weights (hoisted out of
    the per-call path).  Returns (w0 bf16, b0 f32, w1 bf16, b1 f32)."""
    w0s, b0s, w1s, b1s, w0h, b0h, w1h, b1h = params   # (cin,cout) / (1,cout)
    hid = w0s.shape[1]
    bf16, f32 = jnp.bfloat16, jnp.float32

    w0 = jnp.concatenate([w0s.T, w0h.T], axis=0).astype(bf16)            # (2H, 128)
    b0 = jnp.concatenate([b0s, b0h], axis=1).reshape(2 * hid, 1).astype(f32)

    w1 = jnp.zeros((2 * inplanes, 2 * hid), f32)
    w1 = w1.at[:inplanes, :hid].set(w1s.T.astype(f32))
    w1 = w1.at[inplanes:, hid:].set(w1h.T.astype(f32))
    w1 = w1.astype(bf16)                                                 # (2C, 2H)

    # Fold the "+1" of (scale + 1) into the scale-branch bias rows.
    b1 = jnp.concatenate([b1s + 1.0, b1h], axis=1)
    b1 = b1.reshape(2 * inplanes, 1).astype(f32)
    return w0, b0, w1, b1


def sft_uv_layer(feat_nchw, cond_nchw, fused_params, *, tile_pix=8192):
    """feat_nchw: (N, inplanes, H, W); cond_nchw: (N, 128, H, W).
    fused_params: output of fuse_sft_params()."""
    n, c_feat, h, w = feat_nchw.shape
    nc, c_cond, hc, wc = cond_nchw.shape
    assert c_cond == 128 and (nc, hc, wc) == (n, h, w)

    w0, b0, w1, b1 = fused_params
    hid2 = w0.shape[0]                       # 2 * hidden

    hw = h * w
    # Pixel tile: multiple of 128, no larger than (rounded-up) H*W.
    tp = max(128, min(tile_pix, pl.cdiv(hw, 128) * 128))
    tp = pl.cdiv(tp, 128) * 128

    # NCHW -> (N, C, H*W): pure reshape, no transpose, no padding copy.
    feat = feat_nchw.reshape(n, c_feat, hw)
    cond = cond_nchw.reshape(n, c_cond, hw)

    # No pad / slice round-trip: Pallas masks the partial edge tile.  All ops
    # are lane-independent (matmuls contract only the channel axis), so the
    # garbage lanes of the edge tile never affect valid outputs.
    grid = (n, pl.cdiv(hw, tp))

    cond_spec = pl.BlockSpec((None, c_cond, tp), lambda b, p: (b, 0, p))
    feat_spec = pl.BlockSpec((None, c_feat, tp), lambda b, p: (b, 0, p))
    full = lambda shape: pl.BlockSpec(shape, lambda b, p: (0, 0))

    m_total = n * hw
    cond_bytes = cond.dtype.itemsize
    feat_bytes = feat.dtype.itemsize
    cost = pl.CostEstimate(
        flops=2 * m_total * (hid2 * c_cond + 2 * c_feat * hid2)
              + 2 * m_total * c_feat,
        transcendentals=0,
        bytes_accessed=(m_total * c_cond * cond_bytes
                        + 2 * m_total * c_feat * feat_bytes
                        + w0.size * 2 + b0.size * 4 + w1.size * 2 + b1.size * 4),
    )

    out = pl.pallas_call(
        _sft_uv_kernel,
        out_shape=jax.ShapeDtypeStruct((n, c_feat, hw), feat_nchw.dtype),
        grid_spec=pltpu.PrefetchScalarGridSpec(
            num_scalar_prefetch=0,
            grid=grid,
            in_specs=[
                cond_spec,                      # cond tile   (128, TP)
                feat_spec,                      # feat tile   (C, TP)
                full((hid2, c_cond)),           # fused W0    (2H, 128) bf16
                full((hid2, 1)),                # fused b0    f32
                full((2 * c_feat, hid2)),       # block-diag W1 (2C, 2H) bf16
                full((2 * c_feat, 1)),          # fused b1    f32 (+1 folded in)
            ],
            out_specs=feat_spec,                # lane-dense (C, TP) output
        ),
        compiler_params=pltpu.CompilerParams(
            dimension_semantics=("parallel", "parallel"),
            vmem_limit_bytes=48 * 1024 * 1024),
        cost_estimate=cost,
    )(cond, feat, w0, b0, w1, b1)

    return out.reshape(n, c_feat, h, w)


def init_params(key, inplanes, hidden=32, cond_ch=128):
    ks = jax.random.split(key, 8)
    def wb(kw, kb, cin, cout):
        # weights stored (cin, cout) so (pixels, cin) @ (cin, cout) == Conv2d(cin, cout, 1)
        w = jax.random.normal(kw, (cin, cout), jnp.float32) * 0.05
        b = jax.random.normal(kb, (1, cout), jnp.float32) * 0.05
        return w, b
    w0s, b0s = wb(ks[0], ks[1], cond_ch, hidden)
    w1s, b1s = wb(ks[2], ks[3], hidden, inplanes)
    w0h, b0h = wb(ks[4], ks[5], cond_ch, hidden)
    w1h, b1h = wb(ks[6], ks[7], hidden, inplanes)
    return (w0s, b0s, w1s, b1s, w0h, b0h, w1h, b1h)


def reference(feat_nchw, cond_nchw, params):
    """Pure-JAX f32 reference mirroring the PyTorch forward."""
    w0s, b0s, w1s, b1s, w0h, b0h, w1h, b1h = params
    n, c, h, w = cond_nchw.shape
    cond = jnp.transpose(cond_nchw, (0, 2, 3, 1)).reshape(-1, c)
    def branch(w0, b0, w1, b1):
        t = cond @ w0 + b0
        t = jnp.where(t >= 0, t, 0.1 * t)
        return t @ w1 + b1
    scale = branch(w0s, b0s, w1s, b1s)
    shift = branch(w0h, b0h, w1h, b1h)
    cf = feat_nchw.shape[1]
    feat = jnp.transpose(feat_nchw, (0, 2, 3, 1)).reshape(-1, cf)
    out = feat * (scale + 1.0) + shift
    return jnp.transpose(out.reshape(n, h, w, cf), (0, 3, 1, 2))


if __name__ == "__main__":
    inplanes = 4
    N, H, W = 2, 16, 16

    key = jax.random.PRNGKey(0)
    k_feat, k_cond, k_param = jax.random.split(key, 3)

    feat = jax.random.normal(k_feat, (N, inplanes, H, W), jnp.float32)   # x[0]
    cond = jax.random.normal(k_cond, (N, 128, H, W), jnp.float32)        # x[1]
    params = init_params(k_param, inplanes)

    # Weight fusion hoisted out of the per-call path (do once per param set).
    fused = fuse_sft_params(params, inplanes)

    out = sft_uv_layer(feat, cond, fused)
    out = jax.block_until_ready(out)

    ref = reference(feat, cond, params)
    assert out.shape == (N, inplanes, H, W)
    # bf16 MXU operands (f32 accumulation): loosen tolerance vs f32 reference.
    assert jnp.allclose(out, ref, atol=2e-2, rtol=2e-2)

    print("KERNEL_OK")
</pallas_src>

<mosaic_0001>
module attributes {stable_mosaic.version = 11 : i64} {
  func.func @_sft_uv_kernel(%arg0: i32, %arg1: i32, %arg2: memref<1x128x256xf32, #tpu.memory_space<vmem>>, %arg3: memref<1x4x256xf32, #tpu.memory_space<vmem>>, %arg4: memref<64x128xbf16, #tpu.memory_space<vmem>>, %arg5: memref<64x1xf32, #tpu.memory_space<vmem>>, %arg6: memref<8x64xbf16, #tpu.memory_space<vmem>>, %arg7: memref<8x1xf32, #tpu.memory_space<vmem>>, %arg8: memref<1x4x256xf32, #tpu.memory_space<vmem>>) attributes {dimension_semantics = [#tpu.dimension_semantics<parallel>, #tpu.dimension_semantics<parallel>], iteration_bounds = array<i64: 2, 1>, scalar_prefetch = 0 : i64, scratch_operands = 0 : i64, tpu.core_type = #tpu.core_type<tc>, window_params = [{transform_indices = @transform_0, window_bounds = array<i64: 1, 128, 256>}, {transform_indices = @transform_1, window_bounds = array<i64: 1, 4, 256>}, {pipeline_mode = #tpu.pipeline_mode<synchronous>, transform_indices = @transform_2, window_bounds = array<i64: 64, 128>}, {pipeline_mode = #tpu.pipeline_mode<synchronous>, transform_indices = @transform_3, window_bounds = array<i64: 64, 1>}, {pipeline_mode = #tpu.pipeline_mode<synchronous>, transform_indices = @transform_4, window_bounds = array<i64: 8, 64>}, {pipeline_mode = #tpu.pipeline_mode<synchronous>, transform_indices = @transform_5, window_bounds = array<i64: 8, 1>}, {transform_indices = @transform_6, window_bounds = array<i64: 1, 4, 256>}]} {
    %c0 = arith.constant 0 : index
    %c0_0 = arith.constant 0 : index
    %c0_1 = arith.constant 0 : index
    %0 = vector.load %arg2[%c0, %c0_0, %c0_1] : memref<1x128x256xf32, #tpu.memory_space<vmem>>, vector<1x128x256xf32>
    %1 = vector.shape_cast %0 : vector<1x128x256xf32> to vector<128x256xf32>
    %2 = arith.truncf %1 : vector<128x256xf32> to vector<128x256xbf16>
    %c0_2 = arith.constant 0 : index
    %c0_3 = arith.constant 0 : index
    %3 = vector.load %arg4[%c0_2, %c0_3] : memref<64x128xbf16, #tpu.memory_space<vmem>>, vector<64x128xbf16>
    %cst = arith.constant dense<0.000000e+00> : vector<64x256xf32>
    %4 = tpu.matmul %3, %2, %cst {dimension_numbers = #tpu.dot_dimension_numbers<[1], [0], [0], [1], [0, 0, 1, 1], [], []>} : vector<64x128xbf16>, vector<128x256xbf16>, vector<64x256xf32> -> vector<64x256xf32>
    %c0_4 = arith.constant 0 : index
    %c0_5 = arith.constant 0 : index
    %5 = vector.load %arg5[%c0_4, %c0_5] : memref<64x1xf32, #tpu.memory_space<vmem>>, vector<64x1xf32>
    %6 = vector.broadcast %5 : vector<64x1xf32> to vector<64x256xf32>
    %7 = arith.addf %4, %6 : vector<64x256xf32>
    %cst_6 = arith.constant 0.000000e+00 : f32
    %8 = vector.broadcast %cst_6 : f32 to vector<64x256xf32>
    %9 = arith.cmpf oge, %7, %8 : vector<64x256xf32>
    %cst_7 = arith.constant 1.000000e-01 : f32
    %10 = vector.broadcast %cst_7 : f32 to vector<64x256xf32>
    %11 = arith.mulf %10, %7 : vector<64x256xf32>
    %12 = arith.select %9, %7, %11 : vector<64x256xi1>, vector<64x256xf32>
    %c0_8 = arith.constant 0 : index
    %c0_9 = arith.constant 0 : index
    %13 = vector.load %arg6[%c0_8, %c0_9] : memref<8x64xbf16, #tpu.memory_space<vmem>>, vector<8x64xbf16>
    %14 = arith.truncf %12 : vector<64x256xf32> to vector<64x256xbf16>
    %cst_10 = arith.constant dense<0.000000e+00> : vector<8x256xf32>
    %15 = tpu.matmul %13, %14, %cst_10 {dimension_numbers = #tpu.dot_dimension_numbers<[1], [0], [0], [1], [0, 0, 1, 1], [], []>} : vector<8x64xbf16>, vector<64x256xbf16>, vector<8x256xf32> -> vector<8x256xf32>
    %c0_11 = arith.constant 0 : index
    %c0_12 = arith.constant 0 : index
    %16 = vector.load %arg7[%c0_11, %c0_12] : memref<8x1xf32, #tpu.memory_space<vmem>>, vector<8x1xf32>
    %17 = vector.broadcast %16 : vector<8x1xf32> to vector<8x256xf32>
    %18 = arith.addf %15, %17 : vector<8x256xf32>
    %19 = vector.extract_strided_slice %18 {offsets = [0, 0], sizes = [4, 256], strides = [1, 1]} : vector<8x256xf32> to vector<4x256xf32>
    %20 = vector.extract_strided_slice %18 {offsets = [4, 0], sizes = [4, 256], strides = [1, 1]} : vector<8x256xf32> to vector<4x256xf32>
    %c0_13 = arith.constant 0 : index
    %c0_14 = arith.constant 0 : index
    %c0_15 = arith.constant 0 : index
    %21 = vector.load %arg3[%c0_13, %c0_14, %c0_15] : memref<1x4x256xf32, #tpu.memory_space<vmem>>, vector<1x4x256xf32>
    %22 = vector.shape_cast %21 : vector<1x4x256xf32> to vector<4x256xf32>
    %23 = arith.mulf %22, %19 : vector<4x256xf32>
    %24 = arith.addf %23, %20 : vector<4x256xf32>
    %c0_16 = arith.constant 0 : index
    %c0_17 = arith.constant 0 : index
    %c0_18 = arith.constant 0 : index
    %25 = vector.load %arg8[%c0_16, %c0_17, %c0_18] : memref<1x4x256xf32, #tpu.memory_space<vmem>>, vector<1x4x256xf32>
    %26 = vector.shape_cast %25 : vector<1x4x256xf32> to vector<4x256xf32>
    %27 = vector.shape_cast %24 : vector<4x256xf32> to vector<1x4x256xf32>
    tpu.vector_store %arg8[%c0_16, %c0_17, %c0_18], %27 {strides = array<i32>} : memref<1x4x256xf32, #tpu.memory_space<vmem>>, vector<1x4x256xf32>,
    return
  }
  func.func @transform_0(%arg0: i32, %arg1: i32) -> (i32, i32, i32) {
    %c0_i32 = arith.constant 0 : i32
    %c0_i32_0 = arith.constant 0 : i32
    return %arg0, %c0_i32, %arg1 : i32, i32, i32
  }
  func.func @transform_1(%arg0: i32, %arg1: i32) -> (i32, i32, i32) {
    %c0_i32 = arith.constant 0 : i32
    %c0_i32_0 = arith.constant 0 : i32
    return %arg0, %c0_i32, %arg1 : i32, i32, i32
  }
  func.func @transform_2(%arg0: i32, %arg1: i32) -> (i32, i32) {
    %c0_i32 = arith.constant 0 : i32
    %c0_i32_0 = arith.constant 0 : i32
    %c0_i32_1 = arith.constant 0 : i32
    return %c0_i32, %c0_i32_0 : i32, i32
  }
  func.func @transform_3(%arg0: i32, %arg1: i32) -> (i32, i32) {
    %c0_i32 = arith.constant 0 : i32
    %c0_i32_0 = arith.constant 0 : i32
    %c0_i32_1 = arith.constant 0 : i32
    return %c0_i32, %c0_i32_0 : i32, i32
  }
  func.func @transform_4(%arg0: i32, %arg1: i32) -> (i32, i32) {
    %c0_i32 = arith.constant 0 : i32
    %c0_i32_0 = arith.constant 0 : i32
    %c0_i32_1 = arith.constant 0 : i32
    return %c0_i32, %c0_i32_0 : i32, i32
  }
  func.func @transform_5(%arg0: i32, %arg1: i32) -> (i32, i32) {
    %c0_i32 = arith.constant 0 : i32
    %c0_i32_0 = arith.constant 0 : i32
    %c0_i32_1 = arith.constant 0 : i32
    return %c0_i32, %c0_i32_0 : i32, i32
  }
  func.func @transform_6(%arg0: i32, %arg1: i32) -> (i32, i32, i32) {
    %c0_i32 = arith.constant 0 : i32
    %c0_i32_0 = arith.constant 0 : i32
    return %arg0, %c0_i32, %arg1 : i32, i32, i32
  }
}

</mosaic_0001>

<llo_original>
// kernel: tpu_custom_call.1
$region0: #{tpu_custom_call.1}
  #allocation0 [shape = 'u32[]', space=smem, size = 0x4, offset = 0x4, fixed_abs, tag = 'smem constant byte address 0x4 - core index']
  #allocation1 [shape = 'u32[144,128]{1,0:T(1,128)}', space=vmem, size = 0x12000, scoped, tag = 'internal scratch']
  %s0 = inlined_call_operand.hbm [shape: f32[2,128,256], index: 0, kind: input, shape index: {}]
  %s1 = inlined_call_operand.vmem [shape: f32[2,4,256], index: 1, kind: input, shape index: {}]
  %s2 = inlined_call_operand.vmem [shape: bf16[64,128], index: 2, kind: input, shape index: {}]
  %s3 = inlined_call_operand.vmem [shape: f32[64,1], index: 3, kind: input, shape index: {}]
  %s4 = inlined_call_operand.vmem [shape: bf16[8,64], index: 4, kind: input, shape index: {}]
  %s5 = inlined_call_operand.vmem [shape: f32[8,1], index: 5, kind: input, shape index: {}]
  %s6 = inlined_call_operand.hbm [shape: f32[2,4,256], index: 6, kind: output, shape index: {}]
  %s7 = sld [smem:[#allocation0]]
  $region61: #{tpu_custom_call.1} parent=0
    _
  %s9 = ssub.s32 1, %s7
  %s10 = scalar_select 0, %s9, %s7
  $region1: #{tpu_custom_call.1} parent=0
    #allocation2 [shape = 'u8[262144]{0}', space=vmem, size = 0x40000, scoped, tag = 'input window, operand 0']
    #allocation3 [shape = 's32[2]{0}', space=sflag, size = 0x8, scoped, tag = 'scoped memory for tpu_custom_call.1']
    #allocation4 [shape = 's32[2]{0}', space=sflag, size = 0x8, scoped, tag = 'scoped memory for tpu_custom_call.1']
    #allocation5 [shape = 'u8[8192]{0}', space=vmem, size = 0x2000, scoped, tag = 'output window, operand 0']
    %11 = vsyncpa [#allocation3], 0
    %s12 = scalar_lea.sflag [#allocation3], 1
    %13 = vsyncpa %s12, 0
    %14 = vsyncpa [#allocation4], 0
    %s15 = scalar_lea.sflag [#allocation4], 1
    %16 = vsyncpa %s15, 0
    loop: start=0, step=1, limit=4
    $region2: #{tpu_custom_call.1} parent=1 // loop_pre_header
      _
    $region3: #{tpu_custom_call.1} parent=1 // loop_header
      %s18 = sphi 0, %s22
      %p19 = scmp.ge.s32.totalorder %s18, 4
      %s25 = sphi 0, %s37
      %s26 = sphi 0, %s33
      %s27 = sphi 0, %s25
      %s28 = sphi 0, %s26
      %s29 = sphi 0, %s27
      %s30 = sphi 0, %s28
      %s42 = sphi 0, %s44
      %s45 = sphi 0, %s42
      %s46 = sphi 0, %s45
      %s62 = sphi 0, %s46
      %s70 = sphi 0, %s72
      %s73 = sphi 0, %s70
      %s74 = sphi 0, %s73
      %s90 = sphi 0, %s74
      %s94 = sphi 0, %s94
      %s96 = sphi 0, %s94
      %s97 = sphi 0, %s96
      %s111 = sphi 0, %s97
      %s115 = sphi 0, %s115
      %s117 = sphi 0, %s115
      %s118 = sphi 0, %s117
      %s132 = sphi 0, %s118
      %s136 = sphi 0, %s136
      %s138 = sphi 0, %s136
      %s139 = sphi 0, %s138
      %s153 = sphi 0, %s139
      %s157 = sphi 0, %s157
      %s159 = sphi 0, %s157
      %s160 = sphi 0, %s159
      %s174 = sphi 0, %s160
      %s182 = sphi 0, %s184
      %s185 = sphi 0, %s182
      %s186 = sphi 0, %s185
      %s202 = sphi 0, %s186
    $region4: #{tpu_custom_call.1} parent=1 // loop_header_branch
      %21 = sbr.rel (%p19) target = $region8
    $region5: #{tpu_custom_call.1} parent=1 // loop_body
      %s23 = ssub.s32 %s18, 1
      %s24 = ssub.s32 %s18, 2
      %s31 = sadd.s32 1, %s26
      %p32 = scmp.ge.s32.totalorder %s31, 1
      %s33 = scalar_select %p32, 0, %s31
      %s34 = sadd.s32 1, %s25
      %s35 = scalar_select %p32, %s34, %s25
      %p36 = scmp.ge.s32.totalorder %s35, 2
      %s37 = scalar_select %p36, 0, %s35
      %s38 = ssub.s32 %s25, %s37
      %s39 = ssub.s32 %s26, %s33
      %s40 = sor.u32 %s38, %s39
      %p41 = scmp.eq.s32.totalorder %s40, 0
      %s43 = sadd.s32 %s42, 1
      %s44 = scalar_select %p41, %s42, %s43
      %p47 = pneg %p41
      %p48 = scmp.eq.s32.totalorder %s18, 1
      %p49 = por %p47, %p48
      %p50 = scmp.ne.s32.totalorder %s42, %s45
      %p51 = scmp.eq.s32.totalorder %s18, 0
      %p52 = por %p50, %p51
      %p53 = scmp.ne.s32.totalorder %s42, %s45
      %p54 = scmp.eq.s32.totalorder %s23, 1
      %p55 = por %p53, %p54
      %p56 = scmp.ne.s32.totalorder %s45, %s46
      %p57 = scmp.eq.s32.totalorder %s23, 0
      %p58 = por %p56, %p57
      %p59 = scmp.ne.s32.totalorder %s45, %s46
      %p60 = scmp.eq.s32.totalorder %s24, 1
      %p61 = por %p59, %p60
      %p63 = scmp.ne.s32.totalorder %s46, %s62
      %p64 = scmp.eq.s32.totalorder %s24, 0
      %p65 = por %p63, %p64
      %s66 = ssub.s32 %s25, %s37
      %s67 = ssub.s32 %s26, %s33
      %s68 = sor.u32 %s66, %s67
      %p69 = scmp.eq.s32.totalorder %s68, 0
      %s71 = sadd.s32 %s70, 1
      %s72 = scalar_select %p69, %s70, %s71
      %p75 = pneg %p69
      %p76 = scmp.eq.s32.totalorder %s18, 1
      %p77 = por %p75, %p76
      %p78 = scmp.ne.s32.totalorder %s70, %s73
      %p79 = scmp.eq.s32.totalorder %s18, 0
      %p80 = por %p78, %p79
      %p81 = scmp.ne.s32.totalorder %s70, %s73
      %p82 = scmp.eq.s32.totalorder %s23, 1
      %p83 = por %p81, %p82
      %p84 = scmp.ne.s32.totalorder %s73, %s74
      %p85 = scmp.eq.s32.totalorder %s23, 0
      %p86 = por %p84, %p85
      %p87 = scmp.ne.s32.totalorder %s73, %s74
      %p88 = scmp.eq.s32.totalorder %s24, 1
      %p89 = por %p87, %p88
      %p91 = scmp.ne.s32.totalorder %s74, %s90
      %p92 = scmp.eq.s32.totalorder %s24, 0
      %p93 = por %p91, %p92
      %s95 = sadd.s32 %s94, 1
      %p98 = scmp.eq.s32.totalorder %s18, 1
      %p99 = scmp.ne.s32.totalorder %s94, %s96
      %p100 = scmp.eq.s32.totalorder %s18, 0
      %p101 = por %p99, %p100
      %p102 = scmp.ne.s32.totalorder %s94, %s96
      %p103 = scmp.eq.s32.totalorder %s23, 1
      %p104 = por %p102, %p103
      %p105 = scmp.ne.s32.totalorder %s96, %s97
      %p106 = scmp.eq.s32.totalorder %s23, 0
      %p107 = por %p105, %p106
      %p108 = scmp.ne.s32.totalorder %s96, %s97
      %p109 = scmp.eq.s32.totalorder %s24, 1
      %p110 = por %p108, %p109
      %p112 = scmp.ne.s32.totalorder %s97, %s111
      %p113 = scmp.eq.s32.totalorder %s24, 0
      %p114 = por %p112, %p113
      %s116 = sadd.s32 %s115, 1
      %p119 = scmp.eq.s32.totalorder %s18, 1
      %p120 = scmp.ne.s32.totalorder %s115, %s117
      %p121 = scmp.eq.s32.totalorder %s18, 0
      %p122 = por %p120, %p121
      %p123 = scmp.ne.s32.totalorder %s115, %s117
      %p124 = scmp.eq.s32.totalorder %s23, 1
      %p125 = por %p123, %p124
      %p126 = scmp.ne.s32.totalorder %s117, %s118
      %p127 = scmp.eq.s32.totalorder %s23, 0
      %p128 = por %p126, %p127
      %p129 = scmp.ne.s32.totalorder %s117, %s118
      %p130 = scmp.eq.s32.totalorder %s24, 1
      %p131 = por %p129, %p130
      %p133 = scmp.ne.s32.totalorder %s118, %s132
      %p134 = scmp.eq.s32.totalorder %s24, 0
      %p135 = por %p133, %p134
      %s137 = sadd.s32 %s136, 1
      %p140 = scmp.eq.s32.totalorder %s18, 1
      %p141 = scmp.ne.s32.totalorder %s136, %s138
      %p142 = scmp.eq.s32.totalorder %s18, 0
      %p143 = por %p141, %p142
      %p144 = scmp.ne.s32.totalorder %s136, %s138
      %p145 = scmp.eq.s32.totalorder %s23, 1
      %p146 = por %p144, %p145
      %p147 = scmp.ne.s32.totalorder %s138, %s139
      %p148 = scmp.eq.s32.totalorder %s23, 0
      %p149 = por %p147, %p148
      %p150 = scmp.ne.s32.totalorder %s138, %s139
      %p151 = scmp.eq.s32.totalorder %s24, 1
      %p152 = por %p150, %p151
      %p154 = scmp.ne.s32.totalorder %s139, %s153
      %p155 = scmp.eq.s32.totalorder %s24, 0
      %p156 = por %p154, %p155
      %s158 = sadd.s32 %s157, 1
      %p161 = scmp.eq.s32.totalorder %s18, 1
      %p162 = scmp.ne.s32.totalorder %s157, %s159
      %p163 = scmp.eq.s32.totalorder %s18, 0
      %p164 = por %p162, %p163
      %p165 = scmp.ne.s32.totalorder %s157, %s159
      %p166 = scmp.eq.s32.totalorder %s23, 1
      %p167 = por %p165, %p166
      %p168 = scmp.ne.s32.totalorder %s159, %s160
      %p169 = scmp.eq.s32.totalorder %s23, 0
      %p170 = por %p168, %p169
      %p171 = scmp.ne.s32.totalorder %s159, %s160
      %p172 = scmp.eq.s32.totalorder %s24, 1
      %p173 = por %p171, %p172
      %p175 = scmp.ne.s32.totalorder %s160, %s174
      %p176 = scmp.eq.s32.totalorder %s24, 0
      %p177 = por %p175, %p176
      %s178 = ssub.s32 %s25, %s37
      %s179 = ssub.s32 %s26, %s33
      %s180 = sor.u32 %s178, %s179
      %p181 = scmp.eq.s32.totalorder %s180, 0
      %s183 = sadd.s32 %s182, 1
      %s184 = scalar_select %p181, %s182, %s183
      %p187 = pneg %p181
      %p188 = scmp.eq.s32.totalorder %s18, 1
      %p189 = por %p187, %p188
      %p190 = scmp.ne.s32.totalorder %s182, %s185
      %p191 = scmp.eq.s32.totalorder %s18, 0
      %p192 = por %p190, %p191
      %p193 = scmp.ne.s32.totalorder %s182, %s185
      %p194 = scmp.eq.s32.totalorder %s23, 1
      %p195 = por %p193, %p194
      %p196 = scmp.ne.s32.totalorder %s185, %s186
      %p197 = scmp.eq.s32.totalorder %s23, 0
      %p198 = por %p196, %p197
      %p199 = scmp.ne.s32.totalorder %s185, %s186
      %p200 = scmp.eq.s32.totalorder %s24, 1
      %p201 = por %p199, %p200
      %p203 = scmp.ne.s32.totalorder %s186, %s202
      %p204 = scmp.eq.s32.totalorder %s24, 0
      %p205 = por %p203, %p204
      %p206 = scmp.le.s32.totalorder 1, %s18
      %p207 = scmp.lt.s32.totalorder %s18, 3
      %p208 = pnand %p206, %p207
      %p209 = pneg %p208
      // Predicated region
      $region9: #{tpu_custom_call.1} parent=5 // pred_check
        _
      $region10: #{tpu_custom_call.1} parent=5 // pred_check_branch
        %211 = sbr.rel (%p208) target = $region12
      $region11: #{tpu_custom_call.1} parent=5 // pred_region
        %s212 = ssub.s32 %s18, 1
        // Predicated region
        $region13: #{tpu_custom_call.1} parent=11 // pred_check
          %p213 = pneg %p107
        $region14: #{tpu_custom_call.1} parent=11 // pred_check_branch
          %215 = sbr.rel (%p213) target = $region16
        $region15: #{tpu_custom_call.1} parent=11 // pred_region
          _
        $region16: #{tpu_custom_call.1} parent=11 // pred_fallthru
          _
        // Predicated region
        $region17: #{tpu_custom_call.1} parent=11 // pred_check
          %p216 = pneg %p128
        $region18: #{tpu_custom_call.1} parent=11 // pred_check_branch
          %218 = sbr.rel (%p216) target = $region20
        $region19: #{tpu_custom_call.1} parent=11 // pred_region
          _
        $region20: #{tpu_custom_call.1} parent=11 // pred_fallthru
          _
        // Predicated region
        $region21: #{tpu_custom_call.1} parent=11 // pred_check
          %p219 = pneg %p149
        $region22: #{tpu_custom_call.1} parent=11 // pred_check_branch
          %221 = sbr.rel (%p219) target = $region24
        $region23: #{tpu_custom_call.1} parent=11 // pred_region
          _
        $region24: #{tpu_custom_call.1} parent=11 // pred_fallthru
          _
        // Predicated region
        $region25: #{tpu_custom_call.1} parent=11 // pred_check
          %p222 = pneg %p170
        $region26: #{tpu_custom_call.1} parent=11 // pred_check_branch
          %224 = sbr.rel (%p222) target = $region28
        $region27: #{tpu_custom_call.1} parent=11 // pred_region
          _
        $region28: #{tpu_custom_call.1} parent=11 // pred_fallthru
          _
      $region12: #{tpu_custom_call.1} parent=5 // pred_fallthru
        _
      %p225 = scmp.lt.s32.totalorder %s18, 2
      // Predicated region
      $region29: #{tpu_custom_call.1} parent=5 // pred_check
        %p226 = pneg %p225
      $region30: #{tpu_custom_call.1} parent=5 // pred_check_branch
        %228 = sbr.rel (%p226) target = $region32
      $region31: #{tpu_custom_call.1} parent=5 // pred_region
        // Predicated region
        $region33: #{tpu_custom_call.1} parent=31 // pred_check
          %p229 = pneg %p52
        $region34: #{tpu_custom_call.1} parent=31 // pred_check_branch
          %231 = sbr.rel (%p229) target = $region36
        $region35: #{tpu_custom_call.1} parent=31 // pred_region
          %s232 = sand.u32 %s42, 1
          %s233 = scalar_lea.sflag [#allocation3], %s232
          %s234 = sand.u32 %s42, 1
          %s235 = smul.addr %s234, 256
          %s236 = scalar_lea.vmem [#allocation2], %s235
          %s237 = smul.u32 2, %s26
          %s239 = ssub.s32 4096, 4096
          %240 = vsyncadd %s233, %s239
          %s241 = smul.addr %s25, 32
          %s242 = sadd.s32 %s237, %s241
          %s243 = smul.addr %s242, 128
          %s244 = scalar_lea.hbm %s0, %s243
          %s245 = sshll.u32 %s236, 4
          %s246 = int_to_ptr.vmem [resolvable:$true] %s245
          %251 = dma.hbm_to_vmem [thread:$0]  %s244, 4096, %s246, %s233, 256, 256, 16
        $region36: #{tpu_custom_call.1} parent=31 // pred_fallthru
          _
        // Predicated region
        $region37: #{tpu_custom_call.1} parent=31 // pred_check
          %p252 = pneg %p80
        $region38: #{tpu_custom_call.1} parent=31 // pred_check_branch
          %254 = sbr.rel (%p252) target = $region40
        $region39: #{tpu_custom_call.1} parent=31 // pred_region
          %s255 = smul.u32 2, %s26
          %p256 = scmp.lt.s32.totalorder %s25, 1
          %s257 = scalar_select %p256, %s25, 1
          %p258 = scmp.lt.s32.totalorder %s255, 1
          %s259 = scalar_select %p258, %s255, 1
          %s260 = smul.addr %s257, 2
          %s261 = sadd.s32 %s259, %s260
          %s262 = smul.addr %s261, 4
          %s263 = scalar_lea.vmem %s1, %s262
          %s264 = smul.u32 2, %s26
        $region40: #{tpu_custom_call.1} parent=31 // pred_fallthru
          _
      $region32: #{tpu_custom_call.1} parent=5 // pred_fallthru
        _
      %p265 = scmp.le.s32.totalorder 1, %s18
      %p266 = scmp.lt.s32.totalorder %s18, 3
      %p267 = pnand %p265, %p266
      %p268 = pneg %p267
      // Predicated region
      $region41: #{tpu_custom_call.1} parent=5 // pred_check
        _
      $region42: #{tpu_custom_call.1} parent=5 // pred_check_branch
        %270 = sbr.rel (%p267) target = $region44
      $region43: #{tpu_custom_call.1} parent=5 // pred_region
        %s271 = ssub.s32 %s18, 1
        %s272 = sand.u32 %s45, 1
        %s273 = scalar_lea.sflag [#allocation3], %s272
        %s274 = sand.u32 %s45, 1
        %s275 = smul.addr %s274, 256
        %s276 = scalar_lea.vmem [#allocation2], %s275
        // Predicated region
        $region45: #{tpu_custom_call.1} parent=43 // pred_check
          %p277 = pneg %p58
        $region46: #{tpu_custom_call.1} parent=43 // pred_check_branch
          %279 = sbr.rel (%p277) target = $region48
        $region47: #{tpu_custom_call.1} parent=43 // pred_region
          %280 = dma.done %s273, 4096
        $region48: #{tpu_custom_call.1} parent=43 // pred_fallthru
          _
        %s281 = sand.u32 %s45, 1
        %s282 = scalar_lea.sflag [#allocation3], %s281
        %s283 = sand.u32 %s45, 1
        %s284 = smul.addr %s283, 256
        %s285 = scalar_lea.vmem [#allocation2], %s284
        %p286 = pneg %p58
        %p287 = pneg %p55
        %s288 = smul.u32 2, %s28
        %p289 = scmp.lt.s32.totalorder %s27, 1
        %s290 = scalar_select %p289, %s27, 1
        %p291 = scmp.lt.s32.totalorder %s288, 1
        %s292 = scalar_select %p291, %s288, 1
        %s293 = smul.addr %s290, 2
        %s294 = sadd.s32 %s292, %s293
        %s295 = smul.addr %s294, 4
        %s296 = scalar_lea.vmem %s1, %s295
        %p297 = pneg %p86
        %p298 = pneg %p83
        %p299 = pneg %p107
        %p300 = pneg %p104
        %p301 = pneg %p128
        %p302 = pneg %p125
        %p303 = pneg %p149
        %p304 = pneg %p146
        %p305 = pneg %p170
        %p306 = pneg %p167
        %p307 = pneg %p198
        %p308 = pneg %p195
        %s309 = sand.u32 %s185, 1
        %s310 = scalar_lea.sflag [#allocation4], %s309
        %s311 = sand.u32 %s185, 1
        %s312 = smul.addr %s311, 8
        %s313 = scalar_lea.vmem [#allocation5], %s312
        %s314 = smul.u32 2, %s28
        %s315 = smul.u32 2, %s28
        %p316 = scmp.lt.s32.totalorder %s27, 1
        %s317 = scalar_select %p316, %s27, 1
        %p318 = scmp.lt.s32.totalorder %s315, 1
        %s319 = scalar_select %p318, %s315, 1
        %s320 = smul.addr %s317, 2
        %s321 = sadd.s32 %s319, %s320
        %s322 = smul.addr %s321, 4
        %s323 = scalar_lea.vmem %s1, %s322
        %s324 = smul.u32 2, %s28
        %s325 = smul.u32 2, %s28
        %v327 = vld [vmem:[%s276] sm:$0xff]
        %v328 = vld [vmem:[%s276 + $0x8] sm:$0xff]
        %v329 = vld [vmem:[%s276 + $0x10] sm:$0xff]
        %v330 = vld [vmem:[%s276 + $0x18] sm:$0xff]
        %v331 = vld [vmem:[%s276 + $0x20] sm:$0xff]
        %v332 = vld [vmem:[%s276 + $0x28] sm:$0xff]
        %v333 = vld [vmem:[%s276 + $0x30] sm:$0xff]
        %v334 = vld [vmem:[%s276 + $0x38] sm:$0xff]
        %v335 = vld [vmem:[%s276 + $0x40] sm:$0xff]
        %v336 = vld [vmem:[%s276 + $0x48] sm:$0xff]
        %v337 = vld [vmem:[%s276 + $0x50] sm:$0xff]
        %v338 = vld [vmem:[%s276 + $0x58] sm:$0xff]
        %v339 = vld [vmem:[%s276 + $0x60] sm:$0xff]
        %v340 = vld [vmem:[%s276 + $0x68] sm:$0xff]
        %v341 = vld [vmem:[%s276 + $0x70] sm:$0xff]
        %v342 = vld [vmem:[%s276 + $0x78] sm:$0xff]
        %v343 = vld [vmem:[%s276 + $0x80] sm:$0xff]
        %v344 = vld [vmem:[%s276 + $0x88] sm:$0xff]
        %v345 = vld [vmem:[%s276 + $0x90] sm:$0xff]
        %v346 = vld [vmem:[%s276 + $0x98] sm:$0xff]
        %v347 = vld [vmem:[%s276 + $0xa0] sm:$0xff]
        %v348 = vld [vmem:[%s276 + $0xa8] sm:$0xff]
        %v349 = vld [vmem:[%s276 + $0xb0] sm:$0xff]
        %v350 = vld [vmem:[%s276 + $0xb8] sm:$0xff]
        %v351 = vld [vmem:[%s276 + $0xc0] sm:$0xff]
        %v352 = vld [vmem:[%s276 + $0xc8] sm:$0xff]
        %v353 = vld [vmem:[%s276 + $0xd0] sm:$0xff]
        %v354 = vld [vmem:[%s276 + $0xd8] sm:$0xff]
        %v355 = vld [vmem:[%s276 + $0xe0] sm:$0xff]
        %v356 = vld [vmem:[%s276 + $0xe8] sm:$0xff]
        %v357 = vld [vmem:[%s276 + $0xf0] sm:$0xff]
        %v358 = vld [vmem:[%s276 + $0xf8] sm:$0xff]
        %v359 = vpack.c.bf16 %v329, %v327
        %v360 = vpack.c.bf16 %v330, %v328
        %v361 = vpack.c.bf16 %v333, %v331
        %v362 = vpack.c.bf16 %v334, %v332
        %v363 = vpack.c.bf16 %v337, %v335
        %v364 = vpack.c.bf16 %v338, %v336
        %v365 = vpack.c.bf16 %v341, %v339
        %v366 = vpack.c.bf16 %v342, %v340
        %v367 = vpack.c.bf16 %v345, %v343
        %v368 = vpack.c.bf16 %v346, %v344
        %v369 = vpack.c.bf16 %v349, %v347
        %v370 = vpack.c.bf16 %v350, %v348
        %v371 = vpack.c.bf16 %v353, %v351
        %v372 = vpack.c.bf16 %v354, %v352
        %v373 = vpack.c.bf16 %v357, %v355
        %v374 = vpack.c.bf16 %v358, %v356
        %v375 = vld [vmem:[%s2] sm:$0xf]
        %v376 = vld [vmem:[%s2 + $0x4] sm:$0xf]
        %v377 = vld [vmem:[%s2 + $0x8] sm:$0xf]
        %v378 = vld [vmem:[%s2 + $0xc] sm:$0xf]
        %v379 = vld [vmem:[%s2 + $0x10] sm:$0xf]
        %v380 = vld [vmem:[%s2 + $0x14] sm:$0xf]
        %v381 = vld [vmem:[%s2 + $0x18] sm:$0xf]
        %v382 = vld [vmem:[%s2 + $0x1c] sm:$0xf]
        %v383 = vld [vmem:[%s3] sm:$0xff]
        %v384 = vld [vmem:[%s3 + $0x8] sm:$0xff]
        %v385 = vld [vmem:[%s3 + $0x10] sm:$0xff]
        %v386 = vld [vmem:[%s3 + $0x18] sm:$0xff]
        %v387 = vld [vmem:[%s3 + $0x20] sm:$0xff]
        %v388 = vld [vmem:[%s3 + $0x28] sm:$0xff]
        %v389 = vld [vmem:[%s3 + $0x30] sm:$0xff]
        %v390 = vld [vmem:[%s3 + $0x38] sm:$0xff]
        %392 = vset.pattern.permute.xlu0 0
        %393 = vperm.xlu0 %392, %v383
        %v394 = vpop.permute.xlu0 %393
        %397 = vset.pattern.permute.xlu0 0
        %398 = vperm.xlu0 %397, %v384
        %v399 = vpop.permute.xlu0 %398
        %402 = vset.pattern.permute.xlu0 0
        %403 = vperm.xlu0 %402, %v385
        %v404 = vpop.permute.xlu0 %403
        %407 = vset.pattern.permute.xlu0 0
        %408 = vperm.xlu0 %407, %v386
        %v409 = vpop.permute.xlu0 %408
        %412 = vset.pattern.permute.xlu0 0
        %413 = vperm.xlu0 %412, %v387
        %v414 = vpop.permute.xlu0 %413
        %417 = vset.pattern.permute.xlu0 0
        %418 = vperm.xlu0 %417, %v388
        %v419 = vpop.permute.xlu0 %418
        %422 = vset.pattern.permute.xlu0 0
        %423 = vperm.xlu0 %422, %v389
        %v424 = vpop.permute.xlu0 %423
        %427 = vset.pattern.permute.xlu0 0
        %428 = vperm.xlu0 %427, %v390
        %v429 = vpop.permute.xlu0 %428
        %v439 = vunpack.c.l.b16 %v375
        %v440 = vunpack.c.l.b16 %v376
        %v441 = vunpack.c.l.b16 %v377
        %v442 = vunpack.c.l.b16 %v378
        %v443 = vunpack.c.l.b16 %v379
        %v444 = vunpack.c.l.b16 %v380
        %v445 = vunpack.c.l.b16 %v381
        %v446 = vunpack.c.l.b16 %v382
        %v447 = vpack.c.b16 %v440, %v439
        %v448 = vpack.c.b16 %v442, %v441
        %v449 = vpack.c.b16 %v444, %v443
        %v450 = vpack.c.b16 %v446, %v445
        %455 = vmatprep.subr.bf16.mxu0 %v360
        %456 = vmatpush1.bf16.msra.mxu0 %v359
        %457 = vmatprep.subr.bf16.mxu0 %v362
        %458 = vmatpush1.bf16.msra.mxu0 %v361
        %459 = vmatprep.subr.bf16.mxu0 %v364
        %460 = vmatpush1.bf16.msra.mxu0 %v363
        %461 = vmatprep.subr.bf16.mxu0 %v366
        %462 = vmatpush1.bf16.msra.mxu0 %v365
        %463 = vmatprep.subr.bf16.mxu0 %v368
        %464 = vmatpush1.bf16.msra.mxu0 %v367
        %465 = vmatprep.subr.bf16.mxu0 %v370
        %466 = vmatpush1.bf16.msra.mxu0 %v369
        %467 = vmatprep.subr.bf16.mxu0 %v372
        %468 = vmatpush1.bf16.msra.mxu0 %v371
        %469 = vmatprep.subr.bf16.mxu0 %v374
        %470 = vmatpush1.bf16.msra.mxu0 %v373
        %471 = vmatprep.subr.bf16.mxu0 0
        %472 = vmatpush1.bf16.msra.mxu0 0
        %473 = vmatprep.subr.bf16.mxu0 0
        %474 = vmatpush1.bf16.msra.mxu0 0
        %475 = vmatprep.subr.bf16.mxu0 0
        %476 = vmatpush1.bf16.msra.mxu0 0
        %477 = vmatprep.subr.bf16.mxu0 0
        %478 = vmatpush1.bf16.msra.mxu0 0
        %479 = vmatprep.subr.bf16.mxu0 0
        %480 = vmatpush1.bf16.msra.mxu0 0
        %481 = vmatprep.subr.bf16.mxu0 0
        %482 = vmatpush1.bf16.msra.mxu0 0
        %483 = vmatprep.subr.bf16.mxu0 0
        %484 = vmatpush1.bf16.msra.mxu0 0
        %485 = vmatprep.subr.bf16.mxu0 0
        %486 = vmatpush1.bf16.msra.mxu0 0
        %487 = vmatprep.mubr.bf16.mxu0 0
        %488 = vmatmul.mubr.bf16.gmra.mrb[0].mxu0 %v447
        %v489 = vpop.f32.mrb[0].mxu0
        %v490 = vadd.f32 %v394, %v489
        %v491 = vpop.f32.mrb[0].mxu0
        %v492 = vadd.f32 %v394, %v491
        %v493 = vpop.f32.mrb[0].mxu0
        %v494 = vadd.f32 %v399, %v493
        %v495 = vpop.f32.mrb[0].mxu0
        %v496 = vadd.f32 %v399, %v495
        %497 = vmatprep.mubr.bf16.mxu0 0
        %498 = vmatmul.mubr.bf16.gmra.mrb[0].mxu0 %v448
        %v499 = vpop.f32.mrb[0].mxu0
        %v500 = vadd.f32 %v404, %v499
        %v501 = vpop.f32.mrb[0].mxu0
        %v502 = vadd.f32 %v404, %v501
        %v503 = vpop.f32.mrb[0].mxu0
        %v504 = vadd.f32 %v409, %v503
        %v505 = vpop.f32.mrb[0].mxu0
        %v506 = vadd.f32 %v409, %v505
        %507 = vmatprep.mubr.bf16.mxu0 0
        %508 = vmatmul.mubr.bf16.gmra.mrb[0].mxu0 %v449
        %v509 = vpop.f32.mrb[0].mxu0
        %v510 = vadd.f32 %v414, %v509
        %v511 = vpop.f32.mrb[0].mxu0
        %v512 = vadd.f32 %v414, %v511
        %v513 = vpop.f32.mrb[0].mxu0
        %v514 = vadd.f32 %v419, %v513
        %v515 = vpop.f32.mrb[0].mxu0
        %v516 = vadd.f32 %v419, %v515
        %517 = vmatprep.mubr.bf16.mxu0 0
        %518 = vmatmul.mubr.bf16.gmra.mrb[0].mxu0 %v450
        %v519 = vpop.f32.mrb[0].mxu0
        %v520 = vadd.f32 %v424, %v519
        %v521 = vpop.f32.mrb[0].mxu0
        %v522 = vadd.f32 %v424, %v521
        %v523 = vpop.f32.mrb[0].mxu0
        %v524 = vadd.f32 %v429, %v523
        %v525 = vpop.f32.mrb[0].mxu0
        %v526 = vadd.f32 %v429, %v525
        %527 = vdwg.mxu0
        %vm528 = vcmp.ge.f32.partialorder %v490, 0.0
        %vm529 = vcmp.ge.f32.partialorder %v492, 0.0
        %vm530 = vcmp.ge.f32.partialorder %v494, 0.0
        %vm531 = vcmp.ge.f32.partialorder %v496, 0.0
        %vm532 = vcmp.ge.f32.partialorder %v500, 0.0
        %vm533 = vcmp.ge.f32.partialorder %v502, 0.0
        %vm534 = vcmp.ge.f32.partialorder %v504, 0.0
        %vm535 = vcmp.ge.f32.partialorder %v506, 0.0
        %vm536 = vcmp.ge.f32.partialorder %v510, 0.0
        %vm537 = vcmp.ge.f32.partialorder %v512, 0.0
        %vm538 = vcmp.ge.f32.partialorder %v514, 0.0
        %vm539 = vcmp.ge.f32.partialorder %v516, 0.0
        %vm540 = vcmp.ge.f32.partialorder %v520, 0.0
        %vm541 = vcmp.ge.f32.partialorder %v522, 0.0
        %vm542 = vcmp.ge.f32.partialorder %v524, 0.0
        %vm543 = vcmp.ge.f32.partialorder %v526, 0.0
        %v544 = vmul.f32 %v490, 0.1
        %v545 = vmul.f32 %v492, 0.1
        %v546 = vmul.f32 %v494, 0.1
        %v547 = vmul.f32 %v496, 0.1
        %v548 = vmul.f32 %v500, 0.1
        %v549 = vmul.f32 %v502, 0.1
        %v550 = vmul.f32 %v504, 0.1
        %v551 = vmul.f32 %v506, 0.1
        %v552 = vmul.f32 %v510, 0.1
        %v553 = vmul.f32 %v512, 0.1
        %v554 = vmul.f32 %v514, 0.1
        %v555 = vmul.f32 %v516, 0.1
        %v556 = vmul.f32 %v520, 0.1
        %v557 = vmul.f32 %v522, 0.1
        %v558 = vmul.f32 %v524, 0.1
        %v559 = vmul.f32 %v526, 0.1
        %v560 = vsel %vm528, %v490, %v544
        %v561 = vsel %vm529, %v492, %v545
        %v562 = vsel %vm530, %v494, %v546
        %v563 = vsel %vm531, %v496, %v547
        %v564 = vsel %vm532, %v500, %v548
        %v565 = vsel %vm533, %v502, %v549
        %v566 = vsel %vm534, %v504, %v550
        %v567 = vsel %vm535, %v506, %v551
        %v568 = vsel %vm536, %v510, %v552
        %v569 = vsel %vm537, %v512, %v553
        %v570 = vsel %vm538, %v514, %v554
        %v571 = vsel %vm539, %v516, %v555
        %v572 = vsel %vm540, %v520, %v556
        %v573 = vsel %vm541, %v522, %v557
        %v574 = vsel %vm542, %v524, %v558
        %v575 = vsel %vm543, %v526, %v559
        %v576 = vld [vmem:[%s4] sm:$0xf]
        %v577 = vpack.c.bf16 %v562, %v560
        %v578 = vpack.c.bf16 %v563, %v561
        %v579 = vpack.c.bf16 %v566, %v564
        %v580 = vpack.c.bf16 %v567, %v565
        %v581 = vpack.c.bf16 %v570, %v568
        %v582 = vpack.c.bf16 %v571, %v569
        %v583 = vpack.c.bf16 %v574, %v572
        %v584 = vpack.c.bf16 %v575, %v573
        %v585 = vld [vmem:[%s5] sm:$0xff]
        %587 = vset.pattern.permute.xlu0 0
        %588 = vperm.xlu0 %587, %v585
        %v589 = vpop.permute.xlu0 %588
        %vm591 = vcmask 523264
        %v593 = vsel %vm591, %v576, 0
        %595 = vmatprep.subr.bf16.mxu0 %v578
        %596 = vmatpush1.bf16.msra.mxu0 %v577
        %597 = vmatprep.subr.bf16.mxu0 %v580
        %598 = vmatpush1.bf16.msra.mxu0 %v579
        %599 = vmatprep.subr.bf16.mxu0 %v582
        %600 = vmatpush1.bf16.msra.mxu0 %v581
        %601 = vmatprep.subr.bf16.mxu0 %v584
        %602 = vmatpush1.bf16.msra.mxu0 %v583
        %603 = vmatprep.subr.bf16.mxu0 0
        %604 = vmatpush1.bf16.msra.mxu0 0
        %605 = vmatprep.subr.bf16.mxu0 0
        %606 = vmatpush1.bf16.msra.mxu0 0
        %607 = vmatprep.subr.bf16.mxu0 0
        %608 = vmatpush1.bf16.msra.mxu0 0
        %609 = vmatprep.subr.bf16.mxu0 0
        %610 = vmatpush1.bf16.msra.mxu0 0
        %611 = vmatprep.subr.bf16.mxu0 0
        %612 = vmatpush1.bf16.msra.mxu0 0
        %613 = vmatprep.subr.bf16.mxu0 0
        %614 = vmatpush1.bf16.msra.mxu0 0
        %615 = vmatprep.subr.bf16.mxu0 0
        %616 = vmatpush1.bf16.msra.mxu0 0
        %617 = vmatprep.subr.bf16.mxu0 0
        %618 = vmatpush1.bf16.msra.mxu0 0
        %619 = vmatprep.subr.bf16.mxu0 0
        %620 = vmatpush1.bf16.msra.mxu0 0
        %621 = vmatprep.subr.bf16.mxu0 0
        %622 = vmatpush1.bf16.msra.mxu0 0
        %623 = vmatprep.subr.bf16.mxu0 0
        %624 = vmatpush1.bf16.msra.mxu0 0
        %625 = vmatprep.subr.bf16.mxu0 0
        %626 = vmatpush1.bf16.msra.mxu0 0
        %627 = vmatprep.mubr.bf16.mxu0 0
        %628 = vmatmul.mubr.bf16.gmra.mrb[0].mxu0 %v593
        %v629 = vpop.f32.mrb[0].mxu0
        %v630 = vadd.f32 %v589, %v629
        %v631 = vpop.f32.mrb[0].mxu0
        %v632 = vadd.f32 %v589, %v631
        %v633 = vpop.f32.mrb[0].mxu0
        %v634 = vpop.f32.mrb[0].mxu0
        %635 = vdwg.mxu0
        %v636 = vld [vmem:[%s323] sm:$0xff]
        %v639 = vcombine.low %v630, %v632
        %v641 = vmul.f32 %v636, %v639
        %v642 = vcombine.high %v630, %v632
        %v644 = vadd.f32 %v641, %v642
        %645 = vst [vmem:[%s313] sm:$0xff] %v644
        %s646 = sand.u32 %s185, 1
        %s647 = scalar_lea.sflag [#allocation4], %s646
        %s648 = sand.u32 %s185, 1
        %s649 = smul.addr %s648, 8
        %s650 = scalar_lea.vmem [#allocation5], %s649
        // Predicated region
        $region49: #{tpu_custom_call.1} parent=43 // pred_check
          %p651 = pneg %p195
        $region50: #{tpu_custom_call.1} parent=43 // pred_check_branch
          %653 = sbr.rel (%p651) target = $region52
        $region51: #{tpu_custom_call.1} parent=43 // pred_region
          %s654 = smul.u32 2, %s28
          %s656 = ssub.s32 128, 128
          %657 = vsyncadd %s647, %s656
          %s658 = smul.addr %s27, 2
          %s659 = sadd.s32 %s654, %s658
          %s660 = smul.addr %s659, 64
          %s661 = scalar_lea.hbm %s6, %s660
          %s663 = sshll.u32 %s650, 4
          %s664 = int_to_ptr.vmem [resolvable:$true] %s663
          %666 = dma.vmem_to_hbm [thread:$0]  %s664, 128, %s661, %s647
        $region52: #{tpu_custom_call.1} parent=43 // pred_fallthru
          _
      $region44: #{tpu_custom_call.1} parent=5 // pred_fallthru
        _
      %p667 = scmp.le.s32.totalorder 2, %s18
      // Predicated region
      $region53: #{tpu_custom_call.1} parent=5 // pred_check
        %p668 = pneg %p667
      $region54: #{tpu_custom_call.1} parent=5 // pred_check_branch
        %670 = sbr.rel (%p668) target = $region56
      $region55: #{tpu_custom_call.1} parent=5 // pred_region
        %s671 = ssub.s32 %s18, 2
        // Predicated region
        $region57: #{tpu_custom_call.1} parent=55 // pred_check
          %p672 = pneg %p201
        $region58: #{tpu_custom_call.1} parent=55 // pred_check_branch
          %674 = sbr.rel (%p672) target = $region60
        $region59: #{tpu_custom_call.1} parent=55 // pred_region
          %s675 = sand.u32 %s186, 1
          %s676 = scalar_lea.sflag [#allocation4], %s675
          %s677 = sand.u32 %s186, 1
          %s678 = smul.addr %s677, 8
          %s679 = scalar_lea.vmem [#allocation5], %s678
          %680 = dma.done %s676, 128
        $region60: #{tpu_custom_call.1} parent=55 // pred_fallthru
          _
      $region56: #{tpu_custom_call.1} parent=5 // pred_fallthru
        _
    $region6: #{tpu_custom_call.1} parent=1 // loop_footer
      %s22 = sadd.s32 1, %s18
    $region7: #{tpu_custom_call.1} parent=1 // loop_footer_branch
      %17 = sbr.rel target = $region3
    $region8: #{tpu_custom_call.1} parent=1 // loop_exit
      _
    %681 = vsyncpa [#allocation3], 1
    %s682 = scalar_lea.sflag [#allocation3], 1
    %683 = vsyncpa %s682, 1
    %684 = vsyncpa [#allocation4], 1
    %s685 = scalar_lea.sflag [#allocation4], 1
    %686 = vsyncpa %s685, 1

</llo_original>
